<compile_context>
chip_gen: v6e
topology: v6e:2x2x1
jax: 0.10.0
libtpu: 0.0.40
codegen_flags: <defaults>
</compile_context>

<pallas_src>
import jax
import jax.numpy as jnp
from jax.experimental import pallas as pl
from jax.experimental.pallas import tpu as pltpu


# ---------------------------------------------------------------------------
# VMEM budgeting (generation aware: ~64 MiB on v7x, ~128 MiB on v5e/v6e).
# ---------------------------------------------------------------------------
def _vmem_capacity_bytes():
    try:
        cap = getattr(pltpu.get_tpu_info(), "vmem_capacity_bytes", None)
        if cap and int(cap) > 0:
            return int(cap)
    except Exception:
        pass
    return 64 * 1024 * 1024            # conservative fallback (v7x-sized)


def _vmem_limit_bytes(need_bytes):
    """Limit derived from what the kernel actually allocates (x2 margin for
    compiler-internal scratch / promotion temps), never above ~70% of the
    physical VMEM of the chip generation."""
    cap = _vmem_capacity_bytes()
    want = need_bytes * 2 + (8 << 20)
    return int(min(max(want, 32 << 20), int(cap * 0.7)))


# ---------------------------------------------------------------------------
# Tile selection for the 2-D (R=N*C, L=H*W) view.
#   * last dim of a block: multiple of 128 dividing L (or full L),
#   * second-minor dim: divisor of R that is a multiple of the sublane
#     packing (8 f32 / 16 bf16 / 32 int8) or R itself,
#   * block bytes budgeted as f32-equivalent (covers sub-f32 promotion) and
#     capped at ~2 MiB so large inputs get many pipelined grid steps.
# ---------------------------------------------------------------------------
_TARGET_BLOCK_BYTES = 2 << 20          # ~2 MiB f32-equivalent per x block
_MAX_LANES = 512                       # 512-lane tiles already ~85% roofline


def _divisors(n):
    return [d for d in range(1, n + 1) if n % d == 0]


def _pick_lanes(L):
    if L % 128 == 0:
        best = 128
        for d in range(128, min(L, _MAX_LANES) + 1, 128):
            if L % d == 0:
                best = d
        return best
    # Full-extent last dim (allowed by Mosaic).  NOTE: for very large odd L
    # this can exceed the block budget; the VMEM limit below scales with the
    # actual block bytes so the common shapes still compile.
    return L


def _pick_rows(R, l_blk, sub, target_bytes, prefer_split=True):
    cands = sorted({d for d in _divisors(R) if d % sub == 0} | {R})
    feas = [d for d in cands if d * l_blk * 4 <= target_bytes]
    if not feas:
        feas = [cands[0]]              # smallest legal block; limit scales up
    best = feas[-1]
    if prefer_split and best == R:
        # Prefer >=2 row blocks (v7x megacore) unless it shrinks the block >8x.
        multi = [d for d in feas if d < R]
        if multi and multi[-1] * 8 >= best:
            best = multi[-1]
    return best


def _pick_lpar(n_l, nb_r, target_parallel=4, cap=16):
    """Parallel split of the L-block axis so nb_r * n_lpar >= target_parallel
    (keeps both v7x TensorCores busy when N*C is tiny, e.g. stem layers)."""
    divs = [d for d in range(1, min(n_l, cap) + 1) if n_l % d == 0]
    for d in divs:
        if nb_r * d >= target_parallel:
            return d
    return divs[-1]


# ---------------------------------------------------------------------------
# Kernel 1: per-row partial statistics (sum / min / max) of one (r_blk, l_blk)
# block.  min/max stay in the native dtype (no full-block f32 copy); the sum
# accumulates in f32.  Grid = (row blocks [parallel], L-parallel [parallel],
# L-reduction [arbitrary]); the (1, r_blk, 1) f32 partial accumulators stay
# resident across the innermost reduction axis.
# ---------------------------------------------------------------------------
def _stats_kernel(x_ref, sum_ref, min_ref, max_ref):
    xv = x_ref[...]                                            # native dtype
    psum = jnp.sum(xv, axis=1, keepdims=True, dtype=jnp.float32)
    pmin = jnp.min(xv, axis=1, keepdims=True).astype(jnp.float32)
    pmax = jnp.max(xv, axis=1, keepdims=True).astype(jnp.float32)

    j = pl.program_id(2)

    @pl.when(j == 0)
    def _():
        sum_ref[0] = psum
        min_ref[0] = pmin
        max_ref[0] = pmax

    @pl.when(j > 0)
    def _():
        sum_ref[0] = sum_ref[0] + psum
        min_ref[0] = jnp.minimum(min_ref[0], pmin)
        max_ref[0] = jnp.maximum(max_ref[0], pmax)


# ---------------------------------------------------------------------------
# Kernel 2: normalize, strength-reduced to out = x*a + b with one packed
# per-row operand ab = [a; b] of shape (2, N*C, 1).  ab is passed in bf16 when
# x is bf16 so the FMA stays in the native dtype on v6e/v7x.
# ---------------------------------------------------------------------------
def _norm_kernel(x_ref, ab_ref, o_ref):
    a = ab_ref[0]                                              # (r_blk, 1)
    b = ab_ref[1]
    o_ref[...] = (x_ref[...] * a + b).astype(o_ref.dtype)


# ---------------------------------------------------------------------------
# Wrapper (layout is zero-copy; the (C,)-sized finalize and running-buffer
# updates are plain-JAX glue).
# ---------------------------------------------------------------------------
def mean_scale_norm_forward(x, weight, bias, running_mean, running_scale,
                            momentum=0.1, training=True):
    N, C, H, W = x.shape
    L = H * W
    R = N * C
    x2 = x.reshape(R, L)                       # zero-copy, no transpose
    itemsize = x.dtype.itemsize
    sub = max(8, 32 // itemsize)               # sublane packing for this dtype

    if training:
        # ---- pass 1: per-row partial sum / min / max ----------------------
        l_blk1 = _pick_lanes(L)
        r_blk1 = _pick_rows(R, l_blk1, sub, _TARGET_BLOCK_BYTES)
        nb_r1 = R // r_blk1
        n_l1 = L // l_blk1
        n_lpar = _pick_lpar(n_l1, nb_r1)
        n_lred = n_l1 // n_lpar
        blk1_bytes = r_blk1 * l_blk1 * 4       # f32-equivalent (promotion-safe)
        vmem1 = _vmem_limit_bytes(2 * blk1_bytes)   # double-buffered input

        psum, pmin, pmax = pl.pallas_call(
            _stats_kernel,
            out_shape=(jax.ShapeDtypeStruct((n_lpar, R, 1), jnp.float32),) * 3,
            grid_spec=pltpu.PrefetchScalarGridSpec(
                num_scalar_prefetch=0,
                grid=(nb_r1, n_lpar, n_lred),
                in_specs=[pl.BlockSpec(
                    (r_blk1, l_blk1),
                    lambda i, p, j, _n=n_lred: (i, p * _n + j))],
                out_specs=[pl.BlockSpec((1, r_blk1, 1),
                                        lambda i, p, j: (p, i, 0))] * 3,
            ),
            compiler_params=pltpu.CompilerParams(
                dimension_semantics=("parallel", "parallel", "arbitrary"),
                vmem_limit_bytes=vmem1),
        )(x2)

        # Tiny finalize: combine per-(row, L-part) partials -> batch stats.
        sum_r = jnp.sum(psum, axis=(0, 2))                     # (R,)
        min_r = jnp.min(pmin, axis=(0, 2))
        max_r = jnp.max(pmax, axis=(0, 2))
        mean = jnp.sum(sum_r.reshape(N, C), axis=0) / jnp.float32(N * L)
        min_c = jnp.min(min_r.reshape(N, C), axis=0)
        max_c = jnp.max(max_r.reshape(N, C), axis=0)
        # Faithful to the module: scale = 1/(max-min) (inf for a constant
        # channel, exactly like the PyTorch code; propagated to the buffer).
        scale = 1.0 / (max_c - min_c)
        new_running_mean = running_mean * momentum + mean * (1.0 - momentum)
        new_running_scale = running_scale * momentum + scale * (1.0 - momentum)
    else:
        mean = running_mean.astype(jnp.float32)
        scale = running_scale.astype(jnp.float32)
        new_running_mean = running_mean
        new_running_scale = running_scale

    # out = ((x - mean)/scale)*weight + bias  ==  x*a + b   (per channel)
    w = jnp.ones((C,), jnp.float32) if weight is None else weight.astype(jnp.float32)
    bi = jnp.zeros((C,), jnp.float32) if bias is None else bias.astype(jnp.float32)
    a = w / scale
    b = bi - mean * a
    # Per-row (N*C) operands for the 2-D view; keep bf16 activations in bf16.
    ab_dtype = x.dtype if x.dtype == jnp.bfloat16 else jnp.float32
    ab = jnp.stack([jnp.tile(a, N), jnp.tile(b, N)], axis=0)   # (2, R)
    ab = ab.astype(ab_dtype).reshape(2, R, 1)

    # ---- pass 2: elementwise normalize (lane-dense, fully parallel) -------
    l_blk2 = _pick_lanes(L)
    r_blk2 = _pick_rows(R, l_blk2, sub, _TARGET_BLOCK_BYTES)
    nb_r2 = R // r_blk2
    nb_l2 = L // l_blk2
    blk2_bytes = r_blk2 * l_blk2 * 4
    vmem2 = _vmem_limit_bytes(4 * blk2_bytes)   # in + out, double-buffered

    out2 = pl.pallas_call(
        _norm_kernel,
        out_shape=jax.ShapeDtypeStruct((R, L), x.dtype),
        grid_spec=pltpu.PrefetchScalarGridSpec(
            num_scalar_prefetch=0,
            grid=(nb_r2, nb_l2),
            in_specs=[pl.BlockSpec((r_blk2, l_blk2), lambda i, j: (i, j)),
                      pl.BlockSpec((2, r_blk2, 1), lambda i, j: (0, i, 0))],
            out_specs=pl.BlockSpec((r_blk2, l_blk2), lambda i, j: (i, j)),
        ),
        compiler_params=pltpu.CompilerParams(
            dimension_semantics=("parallel", "parallel"),
            vmem_limit_bytes=vmem2),
    )(x2, ab)

    out = out2.reshape(N, C, H, W)              # zero-copy
    return out, new_running_mean, new_running_scale


# ---------------------------------------------------------------------------
# Pure-JAX reference (faithful transcription of the PyTorch module, training).
# ---------------------------------------------------------------------------
def mean_scale_norm_reference(x, weight, bias, running_mean, running_scale,
                              momentum=0.1):
    N, C, H, W = x.shape
    xf = x.reshape(N, C, H * W)
    mean = xf.mean(-1).mean(0)
    scale = 1.0 / (xf.max(-1).max(0) - xf.min(-1).min(0))
    new_rm = running_mean * momentum + mean * (1.0 - momentum)
    new_rs = running_scale * momentum + scale * (1.0 - momentum)
    out = (x - mean[None, :, None, None]) / scale[None, :, None, None]
    out = out * weight[None, :, None, None] + bias[None, :, None, None]
    return out, new_rm, new_rs


if __name__ == "__main__":
    key = jax.random.PRNGKey(0)
    kx, kw, kb = jax.random.split(key, 3)

    N, C, H, W = 2, 4, 16, 16                   # NCHW, matching the module
    x = jax.random.normal(kx, (N, C, H, W), dtype=jnp.float32) * 2.0 + 0.5
    # torch.Tensor(num_features) parameters are uninitialized in the module;
    # use a deterministic random init here.
    weight = 1.0 + 0.1 * jax.random.normal(kw, (C,), dtype=jnp.float32)
    bias = 0.1 * jax.random.normal(kb, (C,), dtype=jnp.float32)
    running_mean = jnp.zeros((C,), dtype=jnp.float32)
    running_scale = jnp.zeros((C,), dtype=jnp.float32)

    out, new_rm, new_rs = mean_scale_norm_forward(
        x, weight, bias, running_mean, running_scale, momentum=0.1,
        training=True)
    out = jax.block_until_ready(out)
    jax.block_until_ready(new_rm)
    jax.block_until_ready(new_rs)

    ref_out, ref_rm, ref_rs = mean_scale_norm_reference(
        x, weight, bias, running_mean, running_scale, momentum=0.1)

    assert out.shape == (N, C, H, W)
    assert jnp.allclose(out, ref_out, rtol=1e-5, atol=1e-4), "output mismatch"
    assert jnp.allclose(new_rm, ref_rm, rtol=1e-5, atol=1e-5), "running_mean mismatch"
    assert jnp.allclose(new_rs, ref_rs, rtol=1e-5, atol=1e-5), "running_scale mismatch"

    # TODO(synk): PyTorch autograd backward (custom VJP) not implemented;
    # forward only, matching the module's training/eval forward semantics.
    print("KERNEL_OK")
</pallas_src>

<mosaic_0001>
module attributes {stable_mosaic.version = 11 : i64} {
  func.func @_stats_kernel(%arg0: i32, %arg1: i32, %arg2: i32, %arg3: memref<8x256xf32, #tpu.memory_space<vmem>>, %arg4: memref<1x8x1xf32, #tpu.memory_space<vmem>>, %arg5: memref<1x8x1xf32, #tpu.memory_space<vmem>>, %arg6: memref<1x8x1xf32, #tpu.memory_space<vmem>>) attributes {dimension_semantics = [#tpu.dimension_semantics<parallel>, #tpu.dimension_semantics<parallel>, #tpu.dimension_semantics<arbitrary>], iteration_bounds = array<i64: 1, 1, 1>, scalar_prefetch = 0 : i64, scratch_operands = 0 : i64, tpu.core_type = #tpu.core_type<tc>, window_params = [{transform_indices = @transform_0, window_bounds = array<i64: 8, 256>}, {transform_indices = @transform_1, window_bounds = array<i64: 1, 8, 1>}, {transform_indices = @transform_2, window_bounds = array<i64: 1, 8, 1>}, {transform_indices = @transform_3, window_bounds = array<i64: 1, 8, 1>}]} {
    %c0 = arith.constant 0 : index
    %c0_0 = arith.constant 0 : index
    %0 = vector.load %arg3[%c0, %c0_0] : memref<8x256xf32, #tpu.memory_space<vmem>>, vector<8x256xf32>
    %cst = arith.constant dense<0.000000e+00> : vector<8xf32>
    %1 = vector.multi_reduction <add>, %0, %cst [1] : vector<8x256xf32> to vector<8xf32>
    %2 = vector.shape_cast %1 : vector<8xf32> to vector<8x1xf32>
    %cst_1 = arith.constant dense<0x7F800000> : vector<8xf32>
    %3 = vector.multi_reduction <minimumf>, %0, %cst_1 [1] : vector<8x256xf32> to vector<8xf32>
    %4 = vector.shape_cast %3 : vector<8xf32> to vector<8x1xf32>
    %cst_2 = arith.constant dense<0xFF800000> : vector<8xf32>
    %5 = vector.multi_reduction <maximumf>, %0, %cst_2 [1] : vector<8x256xf32> to vector<8xf32>
    %6 = vector.shape_cast %5 : vector<8xf32> to vector<8x1xf32>
    %c0_i32 = arith.constant 0 : i32
    %7 = arith.cmpi eq, %arg2, %c0_i32 : i32
    %8 = arith.extui %7 : i1 to i32
    %c0_i32_3 = arith.constant 0 : i32
    %9 = arith.cmpi ne, %8, %c0_i32_3 : i32
    scf.if %9 {
      %c0_6 = arith.constant 0 : index
      %c0_7 = arith.constant 0 : index
      %c0_8 = arith.constant 0 : index
      %13 = vector.load %arg4[%c0_6, %c0_7, %c0_8] : memref<1x8x1xf32, #tpu.memory_space<vmem>>, vector<1x8x1xf32>
      %14 = vector.shape_cast %13 : vector<1x8x1xf32> to vector<8x1xf32>
      %15 = vector.shape_cast %2 : vector<8x1xf32> to vector<1x8x1xf32>
      tpu.vector_store %arg4[%c0_6, %c0_7, %c0_8], %15 {strides = array<i32>} : memref<1x8x1xf32, #tpu.memory_space<vmem>>, vector<1x8x1xf32>,
      %c0_9 = arith.constant 0 : index
      %c0_10 = arith.constant 0 : index
      %c0_11 = arith.constant 0 : index
      %16 = vector.load %arg5[%c0_9, %c0_10, %c0_11] : memref<1x8x1xf32, #tpu.memory_space<vmem>>, vector<1x8x1xf32>
      %17 = vector.shape_cast %16 : vector<1x8x1xf32> to vector<8x1xf32>
      %18 = vector.shape_cast %4 : vector<8x1xf32> to vector<1x8x1xf32>
      tpu.vector_store %arg5[%c0_9, %c0_10, %c0_11], %18 {strides = array<i32>} : memref<1x8x1xf32, #tpu.memory_space<vmem>>, vector<1x8x1xf32>,
      %c0_12 = arith.constant 0 : index
      %c0_13 = arith.constant 0 : index
      %c0_14 = arith.constant 0 : index
      %19 = vector.load %arg6[%c0_12, %c0_13, %c0_14] : memref<1x8x1xf32, #tpu.memory_space<vmem>>, vector<1x8x1xf32>
      %20 = vector.shape_cast %19 : vector<1x8x1xf32> to vector<8x1xf32>
      %21 = vector.shape_cast %6 : vector<8x1xf32> to vector<1x8x1xf32>
      tpu.vector_store %arg6[%c0_12, %c0_13, %c0_14], %21 {strides = array<i32>} : memref<1x8x1xf32, #tpu.memory_space<vmem>>, vector<1x8x1xf32>,
    } else {
    }
    %c0_i32_4 = arith.constant 0 : i32
    %10 = arith.cmpi sgt, %arg2, %c0_i32_4 : i32
    %11 = arith.extui %10 : i1 to i32
    %c0_i32_5 = arith.constant 0 : i32
    %12 = arith.cmpi ne, %11, %c0_i32_5 : i32
    scf.if %12 {
      %c0_6 = arith.constant 0 : index
      %c0_7 = arith.constant 0 : index
      %c0_8 = arith.constant 0 : index
      %13 = vector.load %arg4[%c0_6, %c0_7, %c0_8] : memref<1x8x1xf32, #tpu.memory_space<vmem>>, vector<1x8x1xf32>
      %14 = vector.shape_cast %13 : vector<1x8x1xf32> to vector<8x1xf32>
      %15 = arith.addf %14, %2 : vector<8x1xf32>
      %c0_9 = arith.constant 0 : index
      %c0_10 = arith.constant 0 : index
      %c0_11 = arith.constant 0 : index
      %16 = vector.load %arg4[%c0_9, %c0_10, %c0_11] : memref<1x8x1xf32, #tpu.memory_space<vmem>>, vector<1x8x1xf32>
      %17 = vector.shape_cast %16 : vector<1x8x1xf32> to vector<8x1xf32>
      %18 = vector.shape_cast %15 : vector<8x1xf32> to vector<1x8x1xf32>
      tpu.vector_store %arg4[%c0_9, %c0_10, %c0_11], %18 {strides = array<i32>} : memref<1x8x1xf32, #tpu.memory_space<vmem>>, vector<1x8x1xf32>,
      %c0_12 = arith.constant 0 : index
      %c0_13 = arith.constant 0 : index
      %c0_14 = arith.constant 0 : index
      %19 = vector.load %arg5[%c0_12, %c0_13, %c0_14] : memref<1x8x1xf32, #tpu.memory_space<vmem>>, vector<1x8x1xf32>
      %20 = vector.shape_cast %19 : vector<1x8x1xf32> to vector<8x1xf32>
      %21 = arith.minimumf %20, %4 : vector<8x1xf32>
      %c0_15 = arith.constant 0 : index
      %c0_16 = arith.constant 0 : index
      %c0_17 = arith.constant 0 : index
      %22 = vector.load %arg5[%c0_15, %c0_16, %c0_17] : memref<1x8x1xf32, #tpu.memory_space<vmem>>, vector<1x8x1xf32>
      %23 = vector.shape_cast %22 : vector<1x8x1xf32> to vector<8x1xf32>
      %24 = vector.shape_cast %21 : vector<8x1xf32> to vector<1x8x1xf32>
      tpu.vector_store %arg5[%c0_15, %c0_16, %c0_17], %24 {strides = array<i32>} : memref<1x8x1xf32, #tpu.memory_space<vmem>>, vector<1x8x1xf32>,
      %c0_18 = arith.constant 0 : index
      %c0_19 = arith.constant 0 : index
      %c0_20 = arith.constant 0 : index
      %25 = vector.load %arg6[%c0_18, %c0_19, %c0_20] : memref<1x8x1xf32, #tpu.memory_space<vmem>>, vector<1x8x1xf32>
      %26 = vector.shape_cast %25 : vector<1x8x1xf32> to vector<8x1xf32>
      %27 = arith.maximumf %26, %6 : vector<8x1xf32>
      %c0_21 = arith.constant 0 : index
      %c0_22 = arith.constant 0 : index
      %c0_23 = arith.constant 0 : index
      %28 = vector.load %arg6[%c0_21, %c0_22, %c0_23] : memref<1x8x1xf32, #tpu.memory_space<vmem>>, vector<1x8x1xf32>
      %29 = vector.shape_cast %28 : vector<1x8x1xf32> to vector<8x1xf32>
      %30 = vector.shape_cast %27 : vector<8x1xf32> to vector<1x8x1xf32>
      tpu.vector_store %arg6[%c0_21, %c0_22, %c0_23], %30 {strides = array<i32>} : memref<1x8x1xf32, #tpu.memory_space<vmem>>, vector<1x8x1xf32>,
    } else {
    }
    return
  }
  func.func @transform_0(%arg0: i32, %arg1: i32, %arg2: i32) -> (i32, i32) {
    %c1_i32 = arith.constant 1 : i32
    %0 = arith.muli %arg1, %c1_i32 : i32
    %1 = arith.addi %0, %arg2 : i32
    %c0_i32 = arith.constant 0 : i32
    return %arg0, %1 : i32, i32
  }
  func.func @transform_1(%arg0: i32, %arg1: i32, %arg2: i32) -> (i32, i32, i32) {
    %c0_i32 = arith.constant 0 : i32
    %c0_i32_0 = arith.constant 0 : i32
    return %arg1, %arg0, %c0_i32 : i32, i32, i32
  }
  func.func @transform_2(%arg0: i32, %arg1: i32, %arg2: i32) -> (i32, i32, i32) {
    %c0_i32 = arith.constant 0 : i32
    %c0_i32_0 = arith.constant 0 : i32
    return %arg1, %arg0, %c0_i32 : i32, i32, i32
  }
  func.func @transform_3(%arg0: i32, %arg1: i32, %arg2: i32) -> (i32, i32, i32) {
    %c0_i32 = arith.constant 0 : i32
    %c0_i32_0 = arith.constant 0 : i32
    return %arg1, %arg0, %c0_i32 : i32, i32, i32
  }
}

</mosaic_0001>

<llo_original>
// kernel: tpu_custom_call.1
$region0: #{tpu_custom_call.1}
  #allocation0 [shape = 'u32[]', space=smem, size = 0x4, offset = 0x4, fixed_abs, tag = 'smem constant byte address 0x4 - core index']
  #allocation1 [shape = 'u32[144,128]{1,0:T(1,128)}', space=vmem, size = 0x12000, scoped, tag = 'internal scratch']
  %s0 = inlined_call_operand.hbm [shape: f32[8,256], index: 0, kind: input, shape index: {}]
  %s1 = inlined_call_operand.vmem [shape: f32[1,8,1], index: 1, kind: output, shape index: {0}]
  %s2 = inlined_call_operand.vmem [shape: f32[1,8,1], index: 2, kind: output, shape index: {1}]
  %s3 = inlined_call_operand.vmem [shape: f32[1,8,1], index: 3, kind: output, shape index: {2}]
  %4 = xla_tuple %s1, %s2, %s3
  %s5 = sld [smem:[#allocation0]]
  $region42: #{tpu_custom_call.1} parent=0
    _
  %s7 = ssub.s32 1, %s5
  %s8 = scalar_select 0, %s7, %s5
  $region1: #{tpu_custom_call.1} parent=0
    #allocation2 [shape = 'u8[8192]{0}', space=vmem, size = 0x2000, scoped, tag = 'input window, operand 0, single buffered']
    #allocation3 [shape = 's32[1]{0}', space=sflag, size = 0x4, scoped, tag = 'scoped memory for tpu_custom_call.1']
    %9 = vsyncpa [#allocation3], 0
    // Predicated region
    $region2: #{tpu_custom_call.1} parent=1 // pred_check
      _
    $region3: #{tpu_custom_call.1} parent=1 // pred_check_branch
      %11 = sbr.rel (0) target = $region5
    $region4: #{tpu_custom_call.1} parent=1 // pred_region
      %s12 = sadd.s32 0, 0
      %s13 = smul.u32 2, %s12
      %s15 = ssub.s32 256, 256
      %16 = vsyncadd [#allocation3], %s15
      %s17 = smul.addr %s13, 128
      %s18 = scalar_lea.hbm %s0, %s17
      %s20 = sshll.u32 [#allocation2], 4
      %s21 = int_to_ptr.vmem [resolvable:$true] %s20
      %23 = dma.hbm_to_vmem [thread:$0]  %s18, 256, %s21, [#allocation3]
    $region5: #{tpu_custom_call.1} parent=1 // pred_fallthru
      _
    // Predicated region
    $region6: #{tpu_custom_call.1} parent=1 // pred_check
      _
    $region7: #{tpu_custom_call.1} parent=1 // pred_check_branch
      %25 = sbr.rel (0) target = $region9
    $region8: #{tpu_custom_call.1} parent=1 // pred_region
      %26 = dma.done [#allocation3], 256
    $region9: #{tpu_custom_call.1} parent=1 // pred_fallthru
      _
    %s27 = sadd.s32 0, 0
    %s28 = smul.u32 2, %s27
    %v29 = vld [vmem:[#allocation2] sm:$0xff]
    %v30 = vld [vmem:[#allocation2 + $0x8] sm:$0xff]
    %v31 = vadd.f32 %v29, %v30
    %32 = vadd.xlane.f32.xlu0 %v31
    %v33 = vpop.xlane.xlu0 %32
    %v34 = vmin.f32 %v29, %v30
    %35 = vmin.xlane.f32.xlu0 %v34
    %v36 = vpop.xlane.xlu0 %35
    %v37 = vmax.f32 %v29, %v30
    %38 = vmax.xlane.f32.xlu0 %v37
    %v39 = vpop.xlane.xlu0 %38
    %p40 = scmp.eq.s32.totalorder 0, 0
    // Predicated region
    $region10: #{tpu_custom_call.1} parent=1 // pred_check
      %p41 = pneg %p40
    $region11: #{tpu_custom_call.1} parent=1 // pred_check_branch
      %43 = sbr.rel (%p41) target = $region13
    $region12: #{tpu_custom_call.1} parent=1 // pred_region
      %vm44 = vcmask 7168
      %45 = vst.msk [vmem:[%s1] sm:$0xff] %vm44, %v33
      %46 = vst.msk [vmem:[%s2] sm:$0xff] %vm44, %v36
      %47 = vst.msk [vmem:[%s3] sm:$0xff] %vm44, %v39
    $region13: #{tpu_custom_call.1} parent=1 // pred_fallthru
      _
    %p48 = scmp.gt.s32.totalorder 0, 0
    // Predicated region
    $region14: #{tpu_custom_call.1} parent=1 // pred_check
      %p49 = pneg %p48
    $region15: #{tpu_custom_call.1} parent=1 // pred_check_branch
      %51 = sbr.rel (%p49) target = $region17
    $region16: #{tpu_custom_call.1} parent=1 // pred_region
      %v52 = vld [vmem:[%s1] sm:$0xff]
      %v53 = vadd.f32 %v52, %v33
      %vm54 = vcmask 7168
      %55 = vst.msk [vmem:[%s1] sm:$0xff] %vm54, %v53
      %v56 = vld [vmem:[%s2] sm:$0xff]
      %v57 = vmin.f32 %v56, %v36
      %58 = vst.msk [vmem:[%s2] sm:$0xff] %vm54, %v57
      %v59 = vld [vmem:[%s3] sm:$0xff]
      %v60 = vmax.f32 %v59, %v39
      %61 = vst.msk [vmem:[%s3] sm:$0xff] %vm54, %v60
    $region17: #{tpu_custom_call.1} parent=1 // pred_fallthru
      _
    // Predicated region
    $region18: #{tpu_custom_call.1} parent=1 // pred_check
      _
    $region19: #{tpu_custom_call.1} parent=1 // pred_check_branch
      %63 = sbr.rel (0) target = $region21
    $region20: #{tpu_custom_call.1} parent=1 // pred_region
      _
    $region21: #{tpu_custom_call.1} parent=1 // pred_fallthru
      _
    // Predicated region
    $region22: #{tpu_custom_call.1} parent=1 // pred_check
      _
    $region23: #{tpu_custom_call.1} parent=1 // pred_check_branch
      %65 = sbr.rel (0) target = $region25
    $region24: #{tpu_custom_call.1} parent=1 // pred_region
      _
    $region25: #{tpu_custom_call.1} parent=1 // pred_fallthru
      _
    // Predicated region
    $region26: #{tpu_custom_call.1} parent=1 // pred_check
      _
    $region27: #{tpu_custom_call.1} parent=1 // pred_check_branch
      %67 = sbr.rel (0) target = $region29
    $region28: #{tpu_custom_call.1} parent=1 // pred_region
      _
    $region29: #{tpu_custom_call.1} parent=1 // pred_fallthru
      _
    // Predicated region
    $region30: #{tpu_custom_call.1} parent=1 // pred_check
      _
    $region31: #{tpu_custom_call.1} parent=1 // pred_check_branch
      %69 = sbr.rel (0) target = $region33
    $region32: #{tpu_custom_call.1} parent=1 // pred_region
      _
    $region33: #{tpu_custom_call.1} parent=1 // pred_fallthru
      _
    // Predicated region
    $region34: #{tpu_custom_call.1} parent=1 // pred_check
      _
    $region35: #{tpu_custom_call.1} parent=1 // pred_check_branch
      %71 = sbr.rel (0) target = $region37
    $region36: #{tpu_custom_call.1} parent=1 // pred_region
      _
    $region37: #{tpu_custom_call.1} parent=1 // pred_fallthru
      _
    // Predicated region
    $region38: #{tpu_custom_call.1} parent=1 // pred_check
      _
    $region39: #{tpu_custom_call.1} parent=1 // pred_check_branch
      %73 = sbr.rel (0) target = $region41
    $region40: #{tpu_custom_call.1} parent=1 // pred_region
      _
    $region41: #{tpu_custom_call.1} parent=1 // pred_fallthru
      _
    %74 = vsyncpa [#allocation3], 1

</llo_original>
